<compile_context>
chip_gen: v7x
topology: tpu7x:2x2x1
jax: 0.10.0
libtpu: 0.0.40
codegen_flags: <defaults>
</compile_context>

<pallas_src>
import functools
import numpy as np
import jax
import jax.numpy as jnp
from jax import lax
from jax.experimental import pallas as pl
from jax.experimental.pallas import tpu as pltpu

V_DECAY = 0.9       # membrane leak factor
V_TH = 1.0          # base firing threshold
ADAPT_DECAY = 0.9   # adaptation variable decay
ADAPT_INC = 0.1     # threshold adaptation increment scale

# rows of the fused persistent-state scratch
_V, _A, _S = 0, 1, 2


def _round_up(x, m):
    return -(-x // m) * m


def reservoir_scan_kernel(iin_ref, wrec_t_ref, vout_ref, state_ref, *,
                          time_chunk, group):
    """One grid step = `time_chunk` sequential adaptive-LIF reservoir updates."""
    c = pl.program_id(0)

    # reservoir.reset_state() at the start of the sequence.
    @pl.when(c == 0)
    def _():
        state_ref[...] = jnp.zeros_like(state_ref)

    # W_rec.T stays resident in VMEM (constant index map, single-buffered);
    # the vreg load is hoisted out of the step loop so it is weight-stationary.
    # TODO(synk): for R <= 256 an explicit pltpu.matmul_push_rhs /
    # matmul_acc_lhs / matmul_pop sequence would guarantee a single RHS push
    # per chunk; jnp.dot is used here for portability.
    w = wrec_t_ref[...]                                    # (R, R) bf16

    # Persistent state -> loop carries (vregs); no per-step VMEM round trip.
    v0 = state_ref[_V:_V + 1, :]                           # (1, R) f32 membrane
    a0 = state_ref[_A:_A + 1, :]                           # (1, R) f32 adaptation
    s0 = state_ref[_S:_S + 1, :].astype(jnp.bfloat16)      # (1, R) 0/1 spikes

    n_groups = time_chunk // group

    def group_body(g, carry):
        v, a, s = carry
        base = pl.multiple_of(g * group, group)
        iin_tile = iin_ref[pl.ds(base, group), :]          # one (group, R) load
        rows = []
        for k in range(group):                             # capped 8-step unroll
            # recurrent_current = F.linear(prev_spikes, W_rec); bf16 MXU, f32 acc
            i_rec = jnp.dot(s, w, preferred_element_type=jnp.float32)
            total = iin_tile[k:k + 1, :] + i_rec           # (1, R) f32

            # Adaptive LIF step (assumed dynamics, see TODO above). f32 VPU math.
            v = V_DECAY * v + total
            thr = V_TH + ADAPT_INC * a
            spiked = v >= thr
            spike_f32 = spiked.astype(jnp.float32)
            s = spiked.astype(jnp.bfloat16)                # next-step MXU operand
            v = v - spike_f32 * V_TH                       # subtractive reset
            a = ADAPT_DECAY * a + spike_f32
            rows.append(v)
        # Batched writeback: one unmasked (group, R) store instead of `group`
        # sublane-masked single-row stores (vst slot relief; off critical path).
        vout_ref[pl.ds(base, group), :] = jnp.concatenate(rows, axis=0)
        return (v, a, s)

    v, a, s = lax.fori_loop(0, n_groups, group_body, (v0, a0, s0))

    # Persist state across grid iterations: single write per chunk.
    state_ref[...] = jnp.concatenate([v, a, s.astype(jnp.float32)], axis=0)


def reservoir_forward(x_seq, w_in, w_rec, w_ro, b_ro, *, time_chunk=128, group=8):
    """x_seq: (T, 1, input_size) float32 -> (T, output_size) float32."""
    T, B, I = x_seq.shape
    assert B == 1, "kernel implements the batch=1 path of the torch module"
    # TODO(synk): for batched *independent* sequences add a leading 'parallel'
    # grid axis (dimension_semantics=("parallel", "arbitrary")) so v7x's second
    # TensorCore is used; the torch module shares a single 1-D reservoir state
    # across the batch, so only B == 1 is implemented here.
    R = w_in.shape[0]
    O = w_ro.shape[0]

    x2d = x_seq.reshape(T, I).astype(jnp.float32)
    w_in = w_in.astype(jnp.float32)
    w_rec = w_rec.astype(jnp.float32)
    w_ro_t = w_ro.T.astype(jnp.float32)
    b_ro = b_ro.astype(jnp.float32)

    # Pad reservoir dim to a lane multiple. Padded neurons receive zero input
    # and zero recurrent weight, never spike, and are dropped before readout.
    # (Prefer R as a multiple of 256 on v6e/v7x for full MXU tiles.)
    r_pad = max(_round_up(R, 128), 128)
    if r_pad != R:
        w_in = jnp.pad(w_in, ((0, r_pad - R), (0, 0)))
        w_rec = jnp.pad(w_rec, ((0, r_pad - R), (0, r_pad - R)))

    # ---- hoisted input projection: one batched (T, I) @ (I, R) matmul -------
    i_in = jnp.dot(x2d, w_in.T, preferred_element_type=jnp.float32)   # (T, r_pad)

    # W_rec.T in bf16: MXU-native rate, half the resident VMEM footprint.
    # (spike vector is exactly 0/1 -> products are exact; acc stays f32.)
    w_rec_t = w_rec.T.astype(jnp.bfloat16)

    # ---- time chunking (padded steps are causal tail work, discarded) -------
    time_chunk = max(group, (time_chunk // group) * group)
    tt = int(min(time_chunk, _round_up(T, group)))
    n_chunks = -(-T // tt)
    t_pad = n_chunks * tt
    if t_pad != T:
        i_in = jnp.pad(i_in, ((0, t_pad - T), (0, 0)))

    # ---- VMEM budget: always pass an explicit limit (v5e default scoped VMEM
    #      is only 16 MiB; v7x physical is 64 MiB). ---------------------------
    est_vmem = (2 * r_pad * r_pad          # W_rec.T bf16, single-buffered
                + 4 * 2 * tt * r_pad       # i_in block, double-buffered
                + 4 * 2 * tt * r_pad       # v_trace block, double-buffered
                + 4 * 8 * r_pad)           # (3, R) state scratch, sublane-padded
    vmem_limit = int(max(est_vmem + (8 << 20), 32 << 20))

    kernel = functools.partial(reservoir_scan_kernel, time_chunk=tt, group=group)

    v_trace = pl.pallas_call(
        kernel,
        out_shape=jax.ShapeDtypeStruct((t_pad, r_pad), jnp.float32),
        grid_spec=pltpu.PrefetchScalarGridSpec(
            num_scalar_prefetch=0,
            grid=(n_chunks,),
            in_specs=[
                # per-chunk precomputed input current (lane-dense slabs)
                pl.BlockSpec((tt, r_pad), lambda c: (c, 0)),
                # W_rec.T: constant index map + single buffer -> DMA'd once,
                # no wasted second VMEM copy.
                pl.BlockSpec((r_pad, r_pad), lambda c: (0, 0),
                             pipeline_mode=pl.Buffered(1)),
            ],
            out_specs=pl.BlockSpec((tt, r_pad), lambda c: (c, 0)),
            scratch_shapes=[pltpu.VMEM((3, r_pad), jnp.float32)],  # v / adapt / spikes
        ),
        # time-chunk axis carries the recurrence -> must stay sequential.
        compiler_params=pltpu.CompilerParams(
            dimension_semantics=("arbitrary",),
            vmem_limit_bytes=vmem_limit),
    )(i_in, w_rec_t)

    v_trace = v_trace[:T, :R]                              # drop time/lane padding

    # ---- hoisted readout: one (T, R) @ (R, O) matmul + bias ------------------
    out = jnp.dot(v_trace, w_ro_t, preferred_element_type=jnp.float32) + b_ro[None, :]
    return out


def init_params(key, input_size, reservoir_size, output_size,
                connectivity=0.1, spectral_radius=0.9):
    """Deterministic parameter construction mirroring the torch __init__."""
    k1, k2, k3, k4, k5 = jax.random.split(key, 5)
    w_in = jax.random.normal(k1, (reservoir_size, input_size), jnp.float32) * 0.1

    w_rec = jax.random.normal(k2, (reservoir_size, reservoir_size), jnp.float32)
    mask = (jax.random.uniform(k3, (reservoir_size, reservoir_size)) < connectivity)
    w_rec = w_rec * mask.astype(jnp.float32)
    # spectral-radius normalization (eig has no TPU kernel -> numpy on host; init glue)
    eig = np.linalg.eigvals(np.asarray(w_rec, dtype=np.float64))
    cur_sr = float(np.max(np.abs(eig)))
    w_rec = w_rec * jnp.float32(spectral_radius / cur_sr)

    # nn.Linear(reservoir_size, output_size) default-style uniform init
    bound = 1.0 / np.sqrt(reservoir_size)
    w_ro = jax.random.uniform(k4, (output_size, reservoir_size), jnp.float32,
                              -bound, bound)
    b_ro = jax.random.uniform(k5, (output_size,), jnp.float32, -bound, bound)
    return w_in, w_rec, w_ro, b_ro


if __name__ == "__main__":
    # R = 256: multiple of 256 -> full MXU tiles on v6e/v7x (and 2x128 on v5e).
    T, B, I, R, O = 8, 1, 16, 256, 8
    key = jax.random.PRNGKey(0)
    k_params, k_x = jax.random.split(key)

    w_in, w_rec, w_ro, b_ro = init_params(k_params, I, R, O)
    x_seq = jax.random.normal(k_x, (T, B, I), jnp.float32)   # (time, batch, features)

    out = reservoir_forward(x_seq, w_in, w_rec, w_ro, b_ro)
    out = jax.block_until_ready(out)
    assert out.shape == (T, O)
    assert bool(jnp.all(jnp.isfinite(out)))
    print("KERNEL_OK")
</pallas_src>

<mosaic_0001>
module attributes {stable_mosaic.version = 11 : i64} {
  func.func @reservoir_scan_kernel(%arg0: i32, %arg1: memref<8x256xf32, #tpu.memory_space<vmem>>, %arg2: memref<256x256xbf16, #tpu.memory_space<vmem>>, %arg3: memref<8x256xf32, #tpu.memory_space<vmem>>, %arg4: memref<3x256xf32, #tpu.memory_space<vmem>>) attributes {dimension_semantics = [#tpu.dimension_semantics<arbitrary>], iteration_bounds = array<i64: 1>, scalar_prefetch = 0 : i64, scratch_operands = 1 : i64, tpu.core_type = #tpu.core_type<tc>, window_params = [{transform_indices = @transform_0, window_bounds = array<i64: 8, 256>}, {pipeline_mode = #tpu.pipeline_mode<synchronous>, transform_indices = @transform_1, window_bounds = array<i64: 256, 256>}, {transform_indices = @transform_2, window_bounds = array<i64: 8, 256>}]} {
    %c0_i32 = arith.constant 0 : i32
    %0 = arith.cmpi eq, %arg0, %c0_i32 : i32
    %1 = arith.extui %0 : i1 to i32
    %c0_i32_0 = arith.constant 0 : i32
    %2 = arith.cmpi ne, %1, %c0_i32_0 : i32
    scf.if %2 {
      %cst_58 = arith.constant 0.000000e+00 : f32
      %194 = vector.broadcast %cst_58 : f32 to vector<3x256xf32>
      %c0_59 = arith.constant 0 : index
      %c0_60 = arith.constant 0 : index
      %195 = vector.load %arg4[%c0_59, %c0_60] : memref<3x256xf32, #tpu.memory_space<vmem>>, vector<3x256xf32>
      tpu.vector_store %arg4[%c0_59, %c0_60], %194 {strides = array<i32>} : memref<3x256xf32, #tpu.memory_space<vmem>>, vector<3x256xf32>,
    } else {
    }
    %c0 = arith.constant 0 : index
    %c0_1 = arith.constant 0 : index
    %3 = vector.load %arg2[%c0, %c0_1] : memref<256x256xbf16, #tpu.memory_space<vmem>>, vector<256x256xbf16>
    %c0_2 = arith.constant 0 : index
    %c0_3 = arith.constant 0 : index
    %4 = vector.load %arg4[%c0_2, %c0_3] : memref<3x256xf32, #tpu.memory_space<vmem>>, vector<1x256xf32>
    %c1 = arith.constant 1 : index
    %c0_4 = arith.constant 0 : index
    %5 = vector.load %arg4[%c1, %c0_4] : memref<3x256xf32, #tpu.memory_space<vmem>>, vector<1x256xf32>
    %c2 = arith.constant 2 : index
    %c0_5 = arith.constant 0 : index
    %6 = vector.load %arg4[%c2, %c0_5] : memref<3x256xf32, #tpu.memory_space<vmem>>, vector<1x256xf32>
    %7 = arith.truncf %6 : vector<1x256xf32> to vector<1x256xbf16>
    %c0_i32_6 = arith.constant 0 : i32
    %c8_i32 = arith.constant 8 : i32
    %8 = arith.muli %c0_i32_6, %c8_i32 : i32
    %9 = tpu.assume_multiple %8, 8 : i32
    %10 = arith.index_cast %9 : i32 to index
    %c0_7 = arith.constant 0 : index
    %11 = vector.load %arg1[%10, %c0_7] : memref<8x256xf32, #tpu.memory_space<vmem>>, vector<8x256xf32>
    %cst = arith.constant dense<0.000000e+00> : vector<1x256xf32>
    %12 = tpu.matmul %7, %3, %cst {dimension_numbers = #tpu.dot_dimension_numbers<[1], [0], [0], [1], [0, 0, 1, 1], [], []>} : vector<1x256xbf16>, vector<256x256xbf16>, vector<1x256xf32> -> vector<1x256xf32>
    %13 = vector.extract_strided_slice %11 {offsets = [0, 0], sizes = [1, 256], strides = [1, 1]} : vector<8x256xf32> to vector<1x256xf32>
    %14 = arith.addf %13, %12 : vector<1x256xf32>
    %cst_8 = arith.constant 0.899999976 : f32
    %15 = vector.broadcast %cst_8 : f32 to vector<1x256xf32>
    %16 = arith.mulf %15, %4 : vector<1x256xf32>
    %17 = arith.addf %16, %14 : vector<1x256xf32>
    %cst_9 = arith.constant 1.000000e-01 : f32
    %18 = vector.broadcast %cst_9 : f32 to vector<1x256xf32>
    %19 = arith.mulf %18, %5 : vector<1x256xf32>
    %cst_10 = arith.constant 1.000000e+00 : f32
    %20 = vector.broadcast %cst_10 : f32 to vector<1x256xf32>
    %21 = arith.addf %20, %19 : vector<1x256xf32>
    %22 = arith.cmpf oge, %17, %21 : vector<1x256xf32>
    %23 = arith.extui %22 : vector<1x256xi1> to vector<1x256xi32>
    %24 = arith.sitofp %23 : vector<1x256xi32> to vector<1x256xf32>
    %25 = arith.extui %22 : vector<1x256xi1> to vector<1x256xi32>
    %26 = arith.sitofp %25 : vector<1x256xi32> to vector<1x256xf32>
    %27 = arith.truncf %26 : vector<1x256xf32> to vector<1x256xbf16>
    %cst_11 = arith.constant 1.000000e+00 : f32
    %28 = vector.broadcast %cst_11 : f32 to vector<1x256xf32>
    %29 = arith.mulf %24, %28 : vector<1x256xf32>
    %30 = arith.subf %17, %29 : vector<1x256xf32>
    %cst_12 = arith.constant 0.899999976 : f32
    %31 = vector.broadcast %cst_12 : f32 to vector<1x256xf32>
    %32 = arith.mulf %31, %5 : vector<1x256xf32>
    %33 = arith.addf %32, %24 : vector<1x256xf32>
    %cst_13 = arith.constant dense<0.000000e+00> : vector<1x256xf32>
    %34 = tpu.matmul %27, %3, %cst_13 {dimension_numbers = #tpu.dot_dimension_numbers<[1], [0], [0], [1], [0, 0, 1, 1], [], []>} : vector<1x256xbf16>, vector<256x256xbf16>, vector<1x256xf32> -> vector<1x256xf32>
    %35 = vector.extract_strided_slice %11 {offsets = [1, 0], sizes = [1, 256], strides = [1, 1]} : vector<8x256xf32> to vector<1x256xf32>
    %36 = arith.addf %35, %34 : vector<1x256xf32>
    %cst_14 = arith.constant 0.899999976 : f32
    %37 = vector.broadcast %cst_14 : f32 to vector<1x256xf32>
    %38 = arith.mulf %37, %30 : vector<1x256xf32>
    %39 = arith.addf %38, %36 : vector<1x256xf32>
    %cst_15 = arith.constant 1.000000e-01 : f32
    %40 = vector.broadcast %cst_15 : f32 to vector<1x256xf32>
    %41 = arith.mulf %40, %33 : vector<1x256xf32>
    %cst_16 = arith.constant 1.000000e+00 : f32
    %42 = vector.broadcast %cst_16 : f32 to vector<1x256xf32>
    %43 = arith.addf %42, %41 : vector<1x256xf32>
    %44 = arith.cmpf oge, %39, %43 : vector<1x256xf32>
    %45 = arith.extui %44 : vector<1x256xi1> to vector<1x256xi32>
    %46 = arith.sitofp %45 : vector<1x256xi32> to vector<1x256xf32>
    %47 = arith.extui %44 : vector<1x256xi1> to vector<1x256xi32>
    %48 = arith.sitofp %47 : vector<1x256xi32> to vector<1x256xf32>
    %49 = arith.truncf %48 : vector<1x256xf32> to vector<1x256xbf16>
    %cst_17 = arith.constant 1.000000e+00 : f32
    %50 = vector.broadcast %cst_17 : f32 to vector<1x256xf32>
    %51 = arith.mulf %46, %50 : vector<1x256xf32>
    %52 = arith.subf %39, %51 : vector<1x256xf32>
    %cst_18 = arith.constant 0.899999976 : f32
    %53 = vector.broadcast %cst_18 : f32 to vector<1x256xf32>
    %54 = arith.mulf %53, %33 : vector<1x256xf32>
    %55 = arith.addf %54, %46 : vector<1x256xf32>
    %cst_19 = arith.constant dense<0.000000e+00> : vector<1x256xf32>
    %56 = tpu.matmul %49, %3, %cst_19 {dimension_numbers = #tpu.dot_dimension_numbers<[1], [0], [0], [1], [0, 0, 1, 1], [], []>} : vector<1x256xbf16>, vector<256x256xbf16>, vector<1x256xf32> -> vector<1x256xf32>
    %57 = vector.extract_strided_slice %11 {offsets = [2, 0], sizes = [1, 256], strides = [1, 1]} : vector<8x256xf32> to vector<1x256xf32>
    %58 = arith.addf %57, %56 : vector<1x256xf32>
    %cst_20 = arith.constant 0.899999976 : f32
    %59 = vector.broadcast %cst_20 : f32 to vector<1x256xf32>
    %60 = arith.mulf %59, %52 : vector<1x256xf32>
    %61 = arith.addf %60, %58 : vector<1x256xf32>
    %cst_21 = arith.constant 1.000000e-01 : f32
    %62 = vector.broadcast %cst_21 : f32 to vector<1x256xf32>
    %63 = arith.mulf %62, %55 : vector<1x256xf32>
    %cst_22 = arith.constant 1.000000e+00 : f32
    %64 = vector.broadcast %cst_22 : f32 to vector<1x256xf32>
    %65 = arith.addf %64, %63 : vector<1x256xf32>
    %66 = arith.cmpf oge, %61, %65 : vector<1x256xf32>
    %67 = arith.extui %66 : vector<1x256xi1> to vector<1x256xi32>
    %68 = arith.sitofp %67 : vector<1x256xi32> to vector<1x256xf32>
    %69 = arith.extui %66 : vector<1x256xi1> to vector<1x256xi32>
    %70 = arith.sitofp %69 : vector<1x256xi32> to vector<1x256xf32>
    %71 = arith.truncf %70 : vector<1x256xf32> to vector<1x256xbf16>
    %cst_23 = arith.constant 1.000000e+00 : f32
    %72 = vector.broadcast %cst_23 : f32 to vector<1x256xf32>
    %73 = arith.mulf %68, %72 : vector<1x256xf32>
    %74 = arith.subf %61, %73 : vector<1x256xf32>
    %cst_24 = arith.constant 0.899999976 : f32
    %75 = vector.broadcast %cst_24 : f32 to vector<1x256xf32>
    %76 = arith.mulf %75, %55 : vector<1x256xf32>
    %77 = arith.addf %76, %68 : vector<1x256xf32>
    %cst_25 = arith.constant dense<0.000000e+00> : vector<1x256xf32>
    %78 = tpu.matmul %71, %3, %cst_25 {dimension_numbers = #tpu.dot_dimension_numbers<[1], [0], [0], [1], [0, 0, 1, 1], [], []>} : vector<1x256xbf16>, vector<256x256xbf16>, vector<1x256xf32> -> vector<1x256xf32>
    %79 = vector.extract_strided_slice %11 {offsets = [3, 0], sizes = [1, 256], strides = [1, 1]} : vector<8x256xf32> to vector<1x256xf32>
    %80 = arith.addf %79, %78 : vector<1x256xf32>
    %cst_26 = arith.constant 0.899999976 : f32
    %81 = vector.broadcast %cst_26 : f32 to vector<1x256xf32>
    %82 = arith.mulf %81, %74 : vector<1x256xf32>
    %83 = arith.addf %82, %80 : vector<1x256xf32>
    %cst_27 = arith.constant 1.000000e-01 : f32
    %84 = vector.broadcast %cst_27 : f32 to vector<1x256xf32>
    %85 = arith.mulf %84, %77 : vector<1x256xf32>
    %cst_28 = arith.constant 1.000000e+00 : f32
    %86 = vector.broadcast %cst_28 : f32 to vector<1x256xf32>
    %87 = arith.addf %86, %85 : vector<1x256xf32>
    %88 = arith.cmpf oge, %83, %87 : vector<1x256xf32>
    %89 = arith.extui %88 : vector<1x256xi1> to vector<1x256xi32>
    %90 = arith.sitofp %89 : vector<1x256xi32> to vector<1x256xf32>
    %91 = arith.extui %88 : vector<1x256xi1> to vector<1x256xi32>
    %92 = arith.sitofp %91 : vector<1x256xi32> to vector<1x256xf32>
    %93 = arith.truncf %92 : vector<1x256xf32> to vector<1x256xbf16>
    %cst_29 = arith.constant 1.000000e+00 : f32
    %94 = vector.broadcast %cst_29 : f32 to vector<1x256xf32>
    %95 = arith.mulf %90, %94 : vector<1x256xf32>
    %96 = arith.subf %83, %95 : vector<1x256xf32>
    %cst_30 = arith.constant 0.899999976 : f32
    %97 = vector.broadcast %cst_30 : f32 to vector<1x256xf32>
    %98 = arith.mulf %97, %77 : vector<1x256xf32>
    %99 = arith.addf %98, %90 : vector<1x256xf32>
    %cst_31 = arith.constant dense<0.000000e+00> : vector<1x256xf32>
    %100 = tpu.matmul %93, %3, %cst_31 {dimension_numbers = #tpu.dot_dimension_numbers<[1], [0], [0], [1], [0, 0, 1, 1], [], []>} : vector<1x256xbf16>, vector<256x256xbf16>, vector<1x256xf32> -> vector<1x256xf32>
    %101 = vector.extract_strided_slice %11 {offsets = [4, 0], sizes = [1, 256], strides = [1, 1]} : vector<8x256xf32> to vector<1x256xf32>
    %102 = arith.addf %101, %100 : vector<1x256xf32>
    %cst_32 = arith.constant 0.899999976 : f32
    %103 = vector.broadcast %cst_32 : f32 to vector<1x256xf32>
    %104 = arith.mulf %103, %96 : vector<1x256xf32>
    %105 = arith.addf %104, %102 : vector<1x256xf32>
    %cst_33 = arith.constant 1.000000e-01 : f32
    %106 = vector.broadcast %cst_33 : f32 to vector<1x256xf32>
    %107 = arith.mulf %106, %99 : vector<1x256xf32>
    %cst_34 = arith.constant 1.000000e+00 : f32
    %108 = vector.broadcast %cst_34 : f32 to vector<1x256xf32>
    %109 = arith.addf %108, %107 : vector<1x256xf32>
    %110 = arith.cmpf oge, %105, %109 : vector<1x256xf32>
    %111 = arith.extui %110 : vector<1x256xi1> to vector<1x256xi32>
    %112 = arith.sitofp %111 : vector<1x256xi32> to vector<1x256xf32>
    %113 = arith.extui %110 : vector<1x256xi1> to vector<1x256xi32>
    %114 = arith.sitofp %113 : vector<1x256xi32> to vector<1x256xf32>
    %115 = arith.truncf %114 : vector<1x256xf32> to vector<1x256xbf16>
    %cst_35 = arith.constant 1.000000e+00 : f32
    %116 = vector.broadcast %cst_35 : f32 to vector<1x256xf32>
    %117 = arith.mulf %112, %116 : vector<1x256xf32>
    %118 = arith.subf %105, %117 : vector<1x256xf32>
    %cst_36 = arith.constant 0.899999976 : f32
    %119 = vector.broadcast %cst_36 : f32 to vector<1x256xf32>
    %120 = arith.mulf %119, %99 : vector<1x256xf32>
    %121 = arith.addf %120, %112 : vector<1x256xf32>
    %cst_37 = arith.constant dense<0.000000e+00> : vector<1x256xf32>
    %122 = tpu.matmul %115, %3, %cst_37 {dimension_numbers = #tpu.dot_dimension_numbers<[1], [0], [0], [1], [0, 0, 1, 1], [], []>} : vector<1x256xbf16>, vector<256x256xbf16>, vector<1x256xf32> -> vector<1x256xf32>
    %123 = vector.extract_strided_slice %11 {offsets = [5, 0], sizes = [1, 256], strides = [1, 1]} : vector<8x256xf32> to vector<1x256xf32>
    %124 = arith.addf %123, %122 : vector<1x256xf32>
    %cst_38 = arith.constant 0.899999976 : f32
    %125 = vector.broadcast %cst_38 : f32 to vector<1x256xf32>
    %126 = arith.mulf %125, %118 : vector<1x256xf32>
    %127 = arith.addf %126, %124 : vector<1x256xf32>
    %cst_39 = arith.constant 1.000000e-01 : f32
    %128 = vector.broadcast %cst_39 : f32 to vector<1x256xf32>
    %129 = arith.mulf %128, %121 : vector<1x256xf32>
    %cst_40 = arith.constant 1.000000e+00 : f32
    %130 = vector.broadcast %cst_40 : f32 to vector<1x256xf32>
    %131 = arith.addf %130, %129 : vector<1x256xf32>
    %132 = arith.cmpf oge, %127, %131 : vector<1x256xf32>
    %133 = arith.extui %132 : vector<1x256xi1> to vector<1x256xi32>
    %134 = arith.sitofp %133 : vector<1x256xi32> to vector<1x256xf32>
    %135 = arith.extui %132 : vector<1x256xi1> to vector<1x256xi32>
    %136 = arith.sitofp %135 : vector<1x256xi32> to vector<1x256xf32>
    %137 = arith.truncf %136 : vector<1x256xf32> to vector<1x256xbf16>
    %cst_41 = arith.constant 1.000000e+00 : f32
    %138 = vector.broadcast %cst_41 : f32 to vector<1x256xf32>
    %139 = arith.mulf %134, %138 : vector<1x256xf32>
    %140 = arith.subf %127, %139 : vector<1x256xf32>
    %cst_42 = arith.constant 0.899999976 : f32
    %141 = vector.broadcast %cst_42 : f32 to vector<1x256xf32>
    %142 = arith.mulf %141, %121 : vector<1x256xf32>
    %143 = arith.addf %142, %134 : vector<1x256xf32>
    %cst_43 = arith.constant dense<0.000000e+00> : vector<1x256xf32>
    %144 = tpu.matmul %137, %3, %cst_43 {dimension_numbers = #tpu.dot_dimension_numbers<[1], [0], [0], [1], [0, 0, 1, 1], [], []>} : vector<1x256xbf16>, vector<256x256xbf16>, vector<1x256xf32> -> vector<1x256xf32>
    %145 = vector.extract_strided_slice %11 {offsets = [6, 0], sizes = [1, 256], strides = [1, 1]} : vector<8x256xf32> to vector<1x256xf32>
    %146 = arith.addf %145, %144 : vector<1x256xf32>
    %cst_44 = arith.constant 0.899999976 : f32
    %147 = vector.broadcast %cst_44 : f32 to vector<1x256xf32>
    %148 = arith.mulf %147, %140 : vector<1x256xf32>
    %149 = arith.addf %148, %146 : vector<1x256xf32>
    %cst_45 = arith.constant 1.000000e-01 : f32
    %150 = vector.broadcast %cst_45 : f32 to vector<1x256xf32>
    %151 = arith.mulf %150, %143 : vector<1x256xf32>
    %cst_46 = arith.constant 1.000000e+00 : f32
    %152 = vector.broadcast %cst_46 : f32 to vector<1x256xf32>
    %153 = arith.addf %152, %151 : vector<1x256xf32>
    %154 = arith.cmpf oge, %149, %153 : vector<1x256xf32>
    %155 = arith.extui %154 : vector<1x256xi1> to vector<1x256xi32>
    %156 = arith.sitofp %155 : vector<1x256xi32> to vector<1x256xf32>
    %157 = arith.extui %154 : vector<1x256xi1> to vector<1x256xi32>
    %158 = arith.sitofp %157 : vector<1x256xi32> to vector<1x256xf32>
    %159 = arith.truncf %158 : vector<1x256xf32> to vector<1x256xbf16>
    %cst_47 = arith.constant 1.000000e+00 : f32
    %160 = vector.broadcast %cst_47 : f32 to vector<1x256xf32>
    %161 = arith.mulf %156, %160 : vector<1x256xf32>
    %162 = arith.subf %149, %161 : vector<1x256xf32>
    %cst_48 = arith.constant 0.899999976 : f32
    %163 = vector.broadcast %cst_48 : f32 to vector<1x256xf32>
    %164 = arith.mulf %163, %143 : vector<1x256xf32>
    %165 = arith.addf %164, %156 : vector<1x256xf32>
    %cst_49 = arith.constant dense<0.000000e+00> : vector<1x256xf32>
    %166 = tpu.matmul %159, %3, %cst_49 {dimension_numbers = #tpu.dot_dimension_numbers<[1], [0], [0], [1], [0, 0, 1, 1], [], []>} : vector<1x256xbf16>, vector<256x256xbf16>, vector<1x256xf32> -> vector<1x256xf32>
    %167 = vector.extract_strided_slice %11 {offsets = [7, 0], sizes = [1, 256], strides = [1, 1]} : vector<8x256xf32> to vector<1x256xf32>
    %168 = arith.addf %167, %166 : vector<1x256xf32>
    %cst_50 = arith.constant 0.899999976 : f32
    %169 = vector.broadcast %cst_50 : f32 to vector<1x256xf32>
    %170 = arith.mulf %169, %162 : vector<1x256xf32>
    %171 = arith.addf %170, %168 : vector<1x256xf32>
    %cst_51 = arith.constant 1.000000e-01 : f32
    %172 = vector.broadcast %cst_51 : f32 to vector<1x256xf32>
    %173 = arith.mulf %172, %165 : vector<1x256xf32>
    %cst_52 = arith.constant 1.000000e+00 : f32
    %174 = vector.broadcast %cst_52 : f32 to vector<1x256xf32>
    %175 = arith.addf %174, %173 : vector<1x256xf32>
    %176 = arith.cmpf oge, %171, %175 : vector<1x256xf32>
    %177 = arith.extui %176 : vector<1x256xi1> to vector<1x256xi32>
    %178 = arith.sitofp %177 : vector<1x256xi32> to vector<1x256xf32>
    %179 = arith.extui %176 : vector<1x256xi1> to vector<1x256xi32>
    %180 = arith.sitofp %179 : vector<1x256xi32> to vector<1x256xf32>
    %181 = arith.truncf %180 : vector<1x256xf32> to vector<1x256xbf16>
    %cst_53 = arith.constant 1.000000e+00 : f32
    %182 = vector.broadcast %cst_53 : f32 to vector<1x256xf32>
    %183 = arith.mulf %178, %182 : vector<1x256xf32>
    %184 = arith.subf %171, %183 : vector<1x256xf32>
    %cst_54 = arith.constant 0.899999976 : f32
    %185 = vector.broadcast %cst_54 : f32 to vector<1x256xf32>
    %186 = arith.mulf %185, %165 : vector<1x256xf32>
    %187 = arith.addf %186, %178 : vector<1x256xf32>
    %188 = tpu.concatenate %30, %52, %74, %96, %118, %140, %162, %184 in 0 : vector<1x256xf32>, vector<1x256xf32>, vector<1x256xf32>, vector<1x256xf32>, vector<1x256xf32>, vector<1x256xf32>, vector<1x256xf32>, vector<1x256xf32> -> vector<8x256xf32>
    %189 = arith.index_cast %9 : i32 to index
    %c0_55 = arith.constant 0 : index
    %190 = vector.load %arg3[%189, %c0_55] : memref<8x256xf32, #tpu.memory_space<vmem>>, vector<8x256xf32>
    tpu.vector_store %arg3[%189, %c0_55], %188 {strides = array<i32>} : memref<8x256xf32, #tpu.memory_space<vmem>>, vector<8x256xf32>,
    %c1_i32 = arith.constant 1 : i32
    %191 = arith.extf %181 : vector<1x256xbf16> to vector<1x256xf32>
    %192 = tpu.concatenate %184, %187, %191 in 0 : vector<1x256xf32>, vector<1x256xf32>, vector<1x256xf32> -> vector<3x256xf32>
    %c0_56 = arith.constant 0 : index
    %c0_57 = arith.constant 0 : index
    %193 = vector.load %arg4[%c0_56, %c0_57] : memref<3x256xf32, #tpu.memory_space<vmem>>, vector<3x256xf32>
    tpu.vector_store %arg4[%c0_56, %c0_57], %192 {strides = array<i32>} : memref<3x256xf32, #tpu.memory_space<vmem>>, vector<3x256xf32>,
    return
  }
  func.func @transform_0(%arg0: i32) -> (i32, i32) {
    %c0_i32 = arith.constant 0 : i32
    %c0_i32_0 = arith.constant 0 : i32
    return %arg0, %c0_i32 : i32, i32
  }
  func.func @transform_1(%arg0: i32) -> (i32, i32) {
    %c0_i32 = arith.constant 0 : i32
    %c0_i32_0 = arith.constant 0 : i32
    %c0_i32_1 = arith.constant 0 : i32
    return %c0_i32, %c0_i32_0 : i32, i32
  }
  func.func @transform_2(%arg0: i32) -> (i32, i32) {
    %c0_i32 = arith.constant 0 : i32
    %c0_i32_0 = arith.constant 0 : i32
    return %arg0, %c0_i32 : i32, i32
  }
}

</mosaic_0001>

<llo_original>
// kernel: tpu_custom_call.1
$region0: #{tpu_custom_call.1}
  #allocation0 [shape = 'u32[]', space=smem, size = 0x4, offset = 0x4, fixed_abs, tag = 'smem constant byte address 0x4 - core index']
  #allocation1 [shape = 'u32[144,128]{1,0:T(1,128)}', space=vmem, size = 0x12000, scoped, tag = 'internal scratch']
  #allocation2 [shape = 'f32[3,256]{1,0:T(4,128)}', space=vmem, size = 0x1000, scoped, tag = 'scratch operand']
  %s0 = inlined_call_operand.hbm [shape: f32[8,256], index: 0, kind: input, shape index: {}]
  %s1 = inlined_call_operand.hbm [shape: bf16[256,256], index: 1, kind: input, shape index: {}]
  %s2 = inlined_call_operand.hbm [shape: f32[8,256], index: 2, kind: output, shape index: {}]
  %s3 = sld [smem:[#allocation0]]
  $region30: #{tpu_custom_call.1} parent=0
    _
  %s5 = ssub.s32 1, %s3
  %s6 = scalar_select 0, %s5, %s3
  $region1: #{tpu_custom_call.1} parent=0
    #allocation3 [shape = 'u8[8192]{0}', space=vmem, size = 0x2000, scoped, tag = 'input window, operand 0, single buffered']
    #allocation4 [shape = 's32[1]{0}', space=sflag, size = 0x4, scoped, tag = 'scoped memory for tpu_custom_call.1']
    #allocation5 [shape = 's32[1]{0}', space=sflag, size = 0x4, scoped, tag = 'scoped memory for tpu_custom_call.1']
    #allocation6 [shape = 'u8[131072]{0}', space=vmem, size = 0x20000, scoped, tag = 'input window, operand 1, single buffered']
    #allocation7 [shape = 's32[1]{0}', space=sflag, size = 0x4, scoped, tag = 'scoped memory for tpu_custom_call.1']
    #allocation8 [shape = 'u8[8192]{0}', space=vmem, size = 0x2000, scoped, tag = 'output window, operand 0, single buffered']
    %7 = vsyncpa [#allocation4], 0
    %8 = vsyncpa [#allocation7], 0
    %9 = vsyncpa [#allocation5], 0
    // Predicated region
    $region2: #{tpu_custom_call.1} parent=1 // pred_check
      _
    $region3: #{tpu_custom_call.1} parent=1 // pred_check_branch
      %11 = sbr.rel (0) target = $region5
    $region4: #{tpu_custom_call.1} parent=1 // pred_region
      %s13 = ssub.s32 256, 256
      %14 = vsyncadd [#allocation4], %s13
      %s16 = sshll.u32 [#allocation3], 4
      %s17 = int_to_ptr.vmem [resolvable:$true] %s16
      %19 = dma.hbm_to_vmem [thread:$0]  %s0, 256, %s17, [#allocation4]
    $region5: #{tpu_custom_call.1} parent=1 // pred_fallthru
      _
    // Predicated region
    $region6: #{tpu_custom_call.1} parent=1 // pred_check
      _
    $region7: #{tpu_custom_call.1} parent=1 // pred_check_branch
      %21 = sbr.rel (0) target = $region9
    $region8: #{tpu_custom_call.1} parent=1 // pred_region
      %s23 = ssub.s32 4096, 4096
      %24 = vsyncadd [#allocation7], %s23
      %s25 = sshll.u32 [#allocation6], 4
      %s26 = int_to_ptr.vmem [resolvable:$true] %s25
      %31 = dma.hbm_to_vmem [thread:$0]  %s1, 4096, %s26, [#allocation7], 128, 128, 8
    $region9: #{tpu_custom_call.1} parent=1 // pred_fallthru
      _
    // Predicated region
    $region10: #{tpu_custom_call.1} parent=1 // pred_check
      _
    $region11: #{tpu_custom_call.1} parent=1 // pred_check_branch
      %33 = sbr.rel (0) target = $region13
    $region12: #{tpu_custom_call.1} parent=1 // pred_region
      %34 = dma.done [#allocation4], 256
    $region13: #{tpu_custom_call.1} parent=1 // pred_fallthru
      _
    // Predicated region
    $region14: #{tpu_custom_call.1} parent=1 // pred_check
      _
    $region15: #{tpu_custom_call.1} parent=1 // pred_check_branch
      %36 = sbr.rel (0) target = $region17
    $region16: #{tpu_custom_call.1} parent=1 // pred_region
      %37 = dma.done [#allocation7], 4096
    $region17: #{tpu_custom_call.1} parent=1 // pred_fallthru
      _
    %p38 = scmp.eq.s32.totalorder 0, 0
    // Predicated region
    $region18: #{tpu_custom_call.1} parent=1 // pred_check
      %p39 = pneg %p38
    $region19: #{tpu_custom_call.1} parent=1 // pred_check_branch
      %41 = sbr.rel (%p39) target = $region21
    $region20: #{tpu_custom_call.1} parent=1 // pred_region
      %42 = vst [vmem:[#allocation2] sm:$0x77] 0.0
    $region21: #{tpu_custom_call.1} parent=1 // pred_fallthru
      _
    %v43 = vld [vmem:[#allocation6] sm:$0xff]
    %v44 = vld [vmem:[#allocation6 + $0x8] sm:$0xff]
    %v45 = vld [vmem:[#allocation6 + $0x10] sm:$0xff]
    %v46 = vld [vmem:[#allocation6 + $0x18] sm:$0xff]
    %v47 = vld [vmem:[#allocation6 + $0x20] sm:$0xff]
    %v48 = vld [vmem:[#allocation6 + $0x28] sm:$0xff]
    %v49 = vld [vmem:[#allocation6 + $0x30] sm:$0xff]
    %v50 = vld [vmem:[#allocation6 + $0x38] sm:$0xff]
    %v51 = vld [vmem:[#allocation6 + $0x40] sm:$0xff]
    %v52 = vld [vmem:[#allocation6 + $0x48] sm:$0xff]
    %v53 = vld [vmem:[#allocation6 + $0x50] sm:$0xff]
    %v54 = vld [vmem:[#allocation6 + $0x58] sm:$0xff]
    %v55 = vld [vmem:[#allocation6 + $0x60] sm:$0xff]
    %v56 = vld [vmem:[#allocation6 + $0x68] sm:$0xff]
    %v57 = vld [vmem:[#allocation6 + $0x70] sm:$0xff]
    %v58 = vld [vmem:[#allocation6 + $0x78] sm:$0xff]
    %v59 = vld [vmem:[#allocation6 + $0x80] sm:$0xff]
    %v60 = vld [vmem:[#allocation6 + $0x88] sm:$0xff]
    %v61 = vld [vmem:[#allocation6 + $0x90] sm:$0xff]
    %v62 = vld [vmem:[#allocation6 + $0x98] sm:$0xff]
    %v63 = vld [vmem:[#allocation6 + $0xa0] sm:$0xff]
    %v64 = vld [vmem:[#allocation6 + $0xa8] sm:$0xff]
    %v65 = vld [vmem:[#allocation6 + $0xb0] sm:$0xff]
    %v66 = vld [vmem:[#allocation6 + $0xb8] sm:$0xff]
    %v67 = vld [vmem:[#allocation6 + $0xc0] sm:$0xff]
    %v68 = vld [vmem:[#allocation6 + $0xc8] sm:$0xff]
    %v69 = vld [vmem:[#allocation6 + $0xd0] sm:$0xff]
    %v70 = vld [vmem:[#allocation6 + $0xd8] sm:$0xff]
    %v71 = vld [vmem:[#allocation6 + $0xe0] sm:$0xff]
    %v72 = vld [vmem:[#allocation6 + $0xe8] sm:$0xff]
    %v73 = vld [vmem:[#allocation6 + $0xf0] sm:$0xff]
    %v74 = vld [vmem:[#allocation6 + $0xf8] sm:$0xff]
    %v75 = vld [vmem:[#allocation2] ss:$4 sm:$0x3]
    %s76 = scalar_lea.vmem [#allocation2], 1
    %v77 = vld [vmem:[%s76] ss:$4 sm:$0x3]
    %s78 = scalar_lea.vmem [#allocation2], 2
    %v79 = vld [vmem:[%s78] ss:$4 sm:$0x3]
    %v81 = vlaneseq
    %v82 = vshrl.u32 %v81, 7
    %v83 = vsub.s32 0, %v82
    %v84 = vrot.slane %v79, %v83
    %v85 = vlaneseq
    %v86 = vshrl.u32 %v85, 7
    %v87 = vsub.s32 1, %v86
    %v88 = vrot.slane %v79, %v87
    %v91 = vpack.c.bf16 %v84, %v84
    %v92 = vpack.c.bf16 %v88, %v88
    %s93 = smul.u32 0, 2
    %s94 = smul.addr %s93, 8
    %s95 = scalar_lea.vmem [#allocation3], %s94
    %v96 = vld [vmem:[%s95] sm:$0xff]
    %v97 = vld [vmem:[%s95 + $0x8] sm:$0xff]
    %v130 = vunpack.c.l.b16 %v43
    %v131 = vunpack.c.h.b16 %v43
    %v132 = vunpack.c.l.b16 %v44
    %v133 = vunpack.c.h.b16 %v44
    %v134 = vunpack.c.l.b16 %v45
    %v135 = vunpack.c.h.b16 %v45
    %v136 = vunpack.c.l.b16 %v46
    %v137 = vunpack.c.h.b16 %v46
    %v138 = vunpack.c.l.b16 %v47
    %v139 = vunpack.c.h.b16 %v47
    %v140 = vunpack.c.l.b16 %v48
    %v141 = vunpack.c.h.b16 %v48
    %v142 = vunpack.c.l.b16 %v49
    %v143 = vunpack.c.h.b16 %v49
    %v144 = vunpack.c.l.b16 %v50
    %v145 = vunpack.c.h.b16 %v50
    %v146 = vunpack.c.l.b16 %v51
    %v147 = vunpack.c.h.b16 %v51
    %v148 = vunpack.c.l.b16 %v52
    %v149 = vunpack.c.h.b16 %v52
    %v150 = vunpack.c.l.b16 %v53
    %v151 = vunpack.c.h.b16 %v53
    %v152 = vunpack.c.l.b16 %v54
    %v153 = vunpack.c.h.b16 %v54
    %v154 = vunpack.c.l.b16 %v55
    %v155 = vunpack.c.h.b16 %v55
    %v156 = vunpack.c.l.b16 %v56
    %v157 = vunpack.c.h.b16 %v56
    %v158 = vunpack.c.l.b16 %v57
    %v159 = vunpack.c.h.b16 %v57
    %v160 = vunpack.c.l.b16 %v58
    %v161 = vunpack.c.h.b16 %v58
    %v162 = vunpack.c.l.b16 %v59
    %v163 = vunpack.c.h.b16 %v59
    %v164 = vunpack.c.l.b16 %v60
    %v165 = vunpack.c.h.b16 %v60
    %v166 = vunpack.c.l.b16 %v61
    %v167 = vunpack.c.h.b16 %v61
    %v168 = vunpack.c.l.b16 %v62
    %v169 = vunpack.c.h.b16 %v62
    %v170 = vunpack.c.l.b16 %v63
    %v171 = vunpack.c.h.b16 %v63
    %v172 = vunpack.c.l.b16 %v64
    %v173 = vunpack.c.h.b16 %v64
    %v174 = vunpack.c.l.b16 %v65
    %v175 = vunpack.c.h.b16 %v65
    %v176 = vunpack.c.l.b16 %v66
    %v177 = vunpack.c.h.b16 %v66
    %v178 = vunpack.c.l.b16 %v67
    %v179 = vunpack.c.h.b16 %v67
    %v180 = vunpack.c.l.b16 %v68
    %v181 = vunpack.c.h.b16 %v68
    %v182 = vunpack.c.l.b16 %v69
    %v183 = vunpack.c.h.b16 %v69
    %v184 = vunpack.c.l.b16 %v70
    %v185 = vunpack.c.h.b16 %v70
    %v186 = vunpack.c.l.b16 %v71
    %v187 = vunpack.c.h.b16 %v71
    %v188 = vunpack.c.l.b16 %v72
    %v189 = vunpack.c.h.b16 %v72
    %v190 = vunpack.c.l.b16 %v73
    %v191 = vunpack.c.h.b16 %v73
    %v192 = vunpack.c.l.b16 %v74
    %v193 = vunpack.c.h.b16 %v74
    %v194 = vpack.c.b16 %v132, %v130
    %v195 = vpack.c.b16 %v133, %v131
    %v196 = vpack.c.b16 %v136, %v134
    %v197 = vpack.c.b16 %v137, %v135
    %v198 = vpack.c.b16 %v140, %v138
    %v199 = vpack.c.b16 %v141, %v139
    %v200 = vpack.c.b16 %v144, %v142
    %v201 = vpack.c.b16 %v145, %v143
    %v202 = vpack.c.b16 %v148, %v146
    %v203 = vpack.c.b16 %v149, %v147
    %v204 = vpack.c.b16 %v152, %v150
    %v205 = vpack.c.b16 %v153, %v151
    %v206 = vpack.c.b16 %v156, %v154
    %v207 = vpack.c.b16 %v157, %v155
    %v208 = vpack.c.b16 %v160, %v158
    %v209 = vpack.c.b16 %v161, %v159
    %v210 = vpack.c.b16 %v164, %v162
    %v211 = vpack.c.b16 %v165, %v163
    %v212 = vpack.c.b16 %v168, %v166
    %v213 = vpack.c.b16 %v169, %v167
    %v214 = vpack.c.b16 %v172, %v170
    %v215 = vpack.c.b16 %v173, %v171
    %v216 = vpack.c.b16 %v176, %v174
    %v217 = vpack.c.b16 %v177, %v175
    %v218 = vpack.c.b16 %v180, %v178
    %v219 = vpack.c.b16 %v181, %v179
    %v220 = vpack.c.b16 %v184, %v182
    %v221 = vpack.c.b16 %v185, %v183
    %v222 = vpack.c.b16 %v188, %v186
    %v223 = vpack.c.b16 %v189, %v187
    %v224 = vpack.c.b16 %v192, %v190
    %v225 = vpack.c.b16 %v193, %v191
    %258 = vmatprep.subr.bf16.mxu0 %v195
    %259 = vmatpush1.bf16.msra.mxu0 %v194
    %260 = vmatprep.subr.bf16.mxu0 %v197
    %261 = vmatpush1.bf16.msra.mxu0 %v196
    %262 = vmatprep.subr.bf16.mxu0 %v199
    %263 = vmatpush1.bf16.msra.mxu0 %v198
    %264 = vmatprep.subr.bf16.mxu0 %v201
    %265 = vmatpush1.bf16.msra.mxu0 %v200
    %266 = vmatprep.subr.bf16.mxu0 %v203
    %267 = vmatpush1.bf16.msra.mxu0 %v202
    %268 = vmatprep.subr.bf16.mxu0 %v205
    %269 = vmatpush1.bf16.msra.mxu0 %v204
    %270 = vmatprep.subr.bf16.mxu0 %v207
    %271 = vmatpush1.bf16.msra.mxu0 %v206
    %272 = vmatprep.subr.bf16.mxu0 %v209
    %273 = vmatpush1.bf16.msra.mxu0 %v208
    %274 = vmatprep.subr.bf16.mxu0 %v211
    %275 = vmatpush1.bf16.msra.mxu0 %v210
    %276 = vmatprep.subr.bf16.mxu0 %v213
    %277 = vmatpush1.bf16.msra.mxu0 %v212
    %278 = vmatprep.subr.bf16.mxu0 %v215
    %279 = vmatpush1.bf16.msra.mxu0 %v214
    %280 = vmatprep.subr.bf16.mxu0 %v217
    %281 = vmatpush1.bf16.msra.mxu0 %v216
    %282 = vmatprep.subr.bf16.mxu0 %v219
    %283 = vmatpush1.bf16.msra.mxu0 %v218
    %284 = vmatprep.subr.bf16.mxu0 %v221
    %285 = vmatpush1.bf16.msra.mxu0 %v220
    %286 = vmatprep.subr.bf16.mxu0 %v223
    %287 = vmatpush1.bf16.msra.mxu0 %v222
    %288 = vmatprep.subr.bf16.mxu0 %v225
    %289 = vmatpush1.bf16.msra.mxu0 %v224
    %290 = vmatprep.mubr.bf16.mxu0 %v92
    %291 = vmatmul.mubr.bf16.gmra.mrb[0].mxu0 %v91
    %v292 = vpop.f32.mrb[0].mxu0
    %v293 = vadd.f32 0.0, %v292
    %v294 = vpop.f32.mrb[0].mxu0
    %v295 = vadd.f32 0.0, %v294
    %v296 = vpop.f32.mrb[0].mxu0
    %v297 = vpop.f32.mrb[0].mxu0
    %298 = vdwg.mxu0
    %v299 = vadd.f32 %v96, %v293
    %v300 = vadd.f32 %v97, %v295
    %v301 = vmul.f32 %v75, 0.9
    %v304 = vcombine.low %v299, %v300
    %v306 = vunpack.c.l.s4 1966171168
    %v307 = vunpack.c.0.s8 %v306
    %v308 = vlaneseq
    %v309 = vshrl.u32 %v308, 7
    %v310 = vsub.s32 %v307, %v309
    %v311 = vrot.slane %v304, %v310
    %v313 = vunpack.c.l.s4 1966171168
    %v314 = vunpack.c.0.s8 %v313
    %v315 = vlaneseq
    %v316 = vshrl.u32 %v315, 7
    %v317 = vsub.s32 %v314, %v316
    %v318 = vrot.slane %v311, %v317
    %v320 = vadd.f32 %v301, %v318
    %v321 = vmul.f32 %v77, 0.1
    %v322 = vadd.f32 %v321, 1.0
    %vm323 = vcmp.ge.f32.partialorder %v320, %v322
    %v324 = vsel %vm323, 1, 0
    %v325 = vcvt.s32.f32 %v324
    %v327 = vlaneseq
    %v328 = vshrl.u32 %v327, 7
    %v329 = vsub.s32 0, %v328
    %v330 = vrot.slane %v325, %v329
    %v331 = vlaneseq
    %v332 = vshrl.u32 %v331, 7
    %v333 = vsub.s32 1, %v332
    %v334 = vrot.slane %v325, %v333
    %v337 = vpack.c.bf16 %v330, %v330
    %v338 = vpack.c.bf16 %v334, %v334
    %v339 = vsub.f32 %v320, %v325
    %v340 = vmul.f32 %v77, 0.9
    %v341 = vadd.f32 %v340, %v325
    %342 = vmatprep.subr.bf16.mxu0 %v195
    %343 = vmatpush1.bf16.msra.mxu0 %v194
    %344 = vmatprep.subr.bf16.mxu0 %v197
    %345 = vmatpush1.bf16.msra.mxu0 %v196
    %346 = vmatprep.subr.bf16.mxu0 %v199
    %347 = vmatpush1.bf16.msra.mxu0 %v198
    %348 = vmatprep.subr.bf16.mxu0 %v201
    %349 = vmatpush1.bf16.msra.mxu0 %v200
    %350 = vmatprep.subr.bf16.mxu0 %v203
    %351 = vmatpush1.bf16.msra.mxu0 %v202
    %352 = vmatprep.subr.bf16.mxu0 %v205
    %353 = vmatpush1.bf16.msra.mxu0 %v204
    %354 = vmatprep.subr.bf16.mxu0 %v207
    %355 = vmatpush1.bf16.msra.mxu0 %v206
    %356 = vmatprep.subr.bf16.mxu0 %v209
    %357 = vmatpush1.bf16.msra.mxu0 %v208
    %358 = vmatprep.subr.bf16.mxu0 %v211
    %359 = vmatpush1.bf16.msra.mxu0 %v210
    %360 = vmatprep.subr.bf16.mxu0 %v213
    %361 = vmatpush1.bf16.msra.mxu0 %v212
    %362 = vmatprep.subr.bf16.mxu0 %v215
    %363 = vmatpush1.bf16.msra.mxu0 %v214
    %364 = vmatprep.subr.bf16.mxu0 %v217
    %365 = vmatpush1.bf16.msra.mxu0 %v216
    %366 = vmatprep.subr.bf16.mxu0 %v219
    %367 = vmatpush1.bf16.msra.mxu0 %v218
    %368 = vmatprep.subr.bf16.mxu0 %v221
    %369 = vmatpush1.bf16.msra.mxu0 %v220
    %370 = vmatprep.subr.bf16.mxu0 %v223
    %371 = vmatpush1.bf16.msra.mxu0 %v222
    %372 = vmatprep.subr.bf16.mxu0 %v225
    %373 = vmatpush1.bf16.msra.mxu0 %v224
    %374 = vmatprep.mubr.bf16.mxu0 %v338
    %375 = vmatmul.mubr.bf16.gmra.mrb[0].mxu0 %v337
    %v376 = vpop.f32.mrb[0].mxu0
    %v377 = vadd.f32 0.0, %v376
    %v378 = vpop.f32.mrb[0].mxu0
    %v379 = vadd.f32 0.0, %v378
    %v380 = vpop.f32.mrb[0].mxu0
    %v381 = vpop.f32.mrb[0].mxu0
    %382 = vdwg.mxu0
    %v385 = vrot.slane %v377, 7
    %v386 = vrot.slane %v379, 7
    %v389 = vadd.f32 %v96, %v385
    %v390 = vadd.f32 %v97, %v386
    %v391 = vmul.f32 %v339, 0.9
    %v394 = vcombine.low %v389, %v390
    %v396 = vunpack.c.l.s4 1966171168
    %v397 = vunpack.c.0.s8 %v396
    %v398 = vlaneseq
    %v399 = vshrl.u32 %v398, 7
    %v400 = vsub.s32 %v397, %v399
    %v401 = vrot.slane %v394, %v400
    %v402 = vcombine.high %v401, %v401
    %v404 = vunpack.c.l.s4 1966171168
    %v405 = vunpack.c.0.s8 %v404
    %v406 = vlaneseq
    %v407 = vshrl.u32 %v406, 7
    %v408 = vsub.s32 %v405, %v407
    %v409 = vrot.slane %v402, %v408
    %v411 = vadd.f32 %v391, %v409
    %v412 = vmul.f32 %v341, 0.1
    %v413 = vadd.f32 %v412, 1.0
    %vm414 = vcmp.ge.f32.partialorder %v411, %v413
    %v415 = vsel %vm414, 1, 0
    %v416 = vcvt.s32.f32 %v415
    %v418 = vlaneseq
    %v419 = vshrl.u32 %v418, 7
    %v420 = vsub.s32 0, %v419
    %v421 = vrot.slane %v416, %v420
    %v422 = vlaneseq
    %v423 = vshrl.u32 %v422, 7
    %v424 = vsub.s32 1, %v423
    %v425 = vrot.slane %v416, %v424
    %v428 = vpack.c.bf16 %v421, %v421
    %v429 = vpack.c.bf16 %v425, %v425
    %v430 = vsub.f32 %v411, %v416
    %v431 = vmul.f32 %v341, 0.9
    %v432 = vadd.f32 %v431, %v416
    %433 = vmatprep.subr.bf16.mxu0 %v195
    %434 = vmatpush1.bf16.msra.mxu0 %v194
    %435 = vmatprep.subr.bf16.mxu0 %v197
    %436 = vmatpush1.bf16.msra.mxu0 %v196
    %437 = vmatprep.subr.bf16.mxu0 %v199
    %438 = vmatpush1.bf16.msra.mxu0 %v198
    %439 = vmatprep.subr.bf16.mxu0 %v201
    %440 = vmatpush1.bf16.msra.mxu0 %v200
    %441 = vmatprep.subr.bf16.mxu0 %v203
    %442 = vmatpush1.bf16.msra.mxu0 %v202
    %443 = vmatprep.subr.bf16.mxu0 %v205
    %444 = vmatpush1.bf16.msra.mxu0 %v204
    %445 = vmatprep.subr.bf16.mxu0 %v207
    %446 = vmatpush1.bf16.msra.mxu0 %v206
    %447 = vmatprep.subr.bf16.mxu0 %v209
    %448 = vmatpush1.bf16.msra.mxu0 %v208
    %449 = vmatprep.subr.bf16.mxu0 %v211
    %450 = vmatpush1.bf16.msra.mxu0 %v210
    %451 = vmatprep.subr.bf16.mxu0 %v213
    %452 = vmatpush1.bf16.msra.mxu0 %v212
    %453 = vmatprep.subr.bf16.mxu0 %v215
    %454 = vmatpush1.bf16.msra.mxu0 %v214
    %455 = vmatprep.subr.bf16.mxu0 %v217
    %456 = vmatpush1.bf16.msra.mxu0 %v216
    %457 = vmatprep.subr.bf16.mxu0 %v219
    %458 = vmatpush1.bf16.msra.mxu0 %v218
    %459 = vmatprep.subr.bf16.mxu0 %v221
    %460 = vmatpush1.bf16.msra.mxu0 %v220
    %461 = vmatprep.subr.bf16.mxu0 %v223
    %462 = vmatpush1.bf16.msra.mxu0 %v222
    %463 = vmatprep.subr.bf16.mxu0 %v225
    %464 = vmatpush1.bf16.msra.mxu0 %v224
    %465 = vmatprep.mubr.bf16.mxu0 %v429
    %466 = vmatmul.mubr.bf16.gmra.mrb[0].mxu0 %v428
    %v467 = vpop.f32.mrb[0].mxu0
    %v468 = vadd.f32 0.0, %v467
    %v469 = vpop.f32.mrb[0].mxu0
    %v470 = vadd.f32 0.0, %v469
    %v471 = vpop.f32.mrb[0].mxu0
    %v472 = vpop.f32.mrb[0].mxu0
    %473 = vdwg.mxu0
    %v476 = vrot.slane %v468, 6
    %v477 = vrot.slane %v470, 6
    %v480 = vadd.f32 %v96, %v476
    %v481 = vadd.f32 %v97, %v477
    %v482 = vmul.f32 %v430, 0.9
    %v485 = vcombine.low %v480, %v481
    %v487 = vunpack.c.l.s4 1966171168
    %v488 = vunpack.c.0.s8 %v487
    %v489 = vlaneseq
    %v490 = vshrl.u32 %v489, 7
    %v491 = vsub.s32 %v488, %v490
    %v492 = vrot.slane %v485, %v491
    %v494 = vunpack.c.l.s4 1966171168
    %v495 = vunpack.c.0.s8 %v494
    %v496 = vlaneseq
    %v497 = vshrl.u32 %v496, 7
    %v498 = vsub.s32 %v495, %v497
    %v499 = vrot.slane %v492, %v498
    %v500 = vcombine.high %v499, %v499
    %v502 = vadd.f32 %v482, %v500
    %v503 = vmul.f32 %v432, 0.1
    %v504 = vadd.f32 %v503, 1.0
    %vm505 = vcmp.ge.f32.partialorder %v502, %v504
    %v506 = vsel %vm505, 1, 0
    %v507 = vcvt.s32.f32 %v506
    %v509 = vlaneseq
    %v510 = vshrl.u32 %v509, 7
    %v511 = vsub.s32 0, %v510
    %v512 = vrot.slane %v507, %v511
    %v513 = vlaneseq
    %v514 = vshrl.u32 %v513, 7
    %v515 = vsub.s32 1, %v514
    %v516 = vrot.slane %v507, %v515
    %v519 = vpack.c.bf16 %v512, %v512
    %v520 = vpack.c.bf16 %v516, %v516
    %v521 = vsub.f32 %v502, %v507
    %v522 = vmul.f32 %v432, 0.9
    %v523 = vadd.f32 %v522, %v507
    %524 = vmatprep.subr.bf16.mxu0 %v195
    %525 = vmatpush1.bf16.msra.mxu0 %v194
    %526 = vmatprep.subr.bf16.mxu0 %v197
    %527 = vmatpush1.bf16.msra.mxu0 %v196
    %528 = vmatprep.subr.bf16.mxu0 %v199
    %529 = vmatpush1.bf16.msra.mxu0 %v198
    %530 = vmatprep.subr.bf16.mxu0 %v201
    %531 = vmatpush1.bf16.msra.mxu0 %v200
    %532 = vmatprep.subr.bf16.mxu0 %v203
    %533 = vmatpush1.bf16.msra.mxu0 %v202
    %534 = vmatprep.subr.bf16.mxu0 %v205
    %535 = vmatpush1.bf16.msra.mxu0 %v204
    %536 = vmatprep.subr.bf16.mxu0 %v207
    %537 = vmatpush1.bf16.msra.mxu0 %v206
    %538 = vmatprep.subr.bf16.mxu0 %v209
    %539 = vmatpush1.bf16.msra.mxu0 %v208
    %540 = vmatprep.subr.bf16.mxu0 %v211
    %541 = vmatpush1.bf16.msra.mxu0 %v210
    %542 = vmatprep.subr.bf16.mxu0 %v213
    %543 = vmatpush1.bf16.msra.mxu0 %v212
    %544 = vmatprep.subr.bf16.mxu0 %v215
    %545 = vmatpush1.bf16.msra.mxu0 %v214
    %546 = vmatprep.subr.bf16.mxu0 %v217
    %547 = vmatpush1.bf16.msra.mxu0 %v216
    %548 = vmatprep.subr.bf16.mxu0 %v219
    %549 = vmatpush1.bf16.msra.mxu0 %v218
    %550 = vmatprep.subr.bf16.mxu0 %v221
    %551 = vmatpush1.bf16.msra.mxu0 %v220
    %552 = vmatprep.subr.bf16.mxu0 %v223
    %553 = vmatpush1.bf16.msra.mxu0 %v222
    %554 = vmatprep.subr.bf16.mxu0 %v225
    %555 = vmatpush1.bf16.msra.mxu0 %v224
    %556 = vmatprep.mubr.bf16.mxu0 %v520
    %557 = vmatmul.mubr.bf16.gmra.mrb[0].mxu0 %v519
    %v558 = vpop.f32.mrb[0].mxu0
    %v559 = vadd.f32 0.0, %v558
    %v560 = vpop.f32.mrb[0].mxu0
    %v561 = vadd.f32 0.0, %v560
    %v562 = vpop.f32.mrb[0].mxu0
    %v563 = vpop.f32.mrb[0].mxu0
    %564 = vdwg.mxu0
    %v567 = vrot.slane %v559, 5
    %v568 = vrot.slane %v561, 5
    %v571 = vadd.f32 %v96, %v567
    %v572 = vadd.f32 %v97, %v568
    %v573 = vmul.f32 %v521, 0.9
    %v576 = vcombine.low %v571, %v572
    %v578 = vunpack.c.l.s4 1966171168
    %v579 = vunpack.c.0.s8 %v578
    %v580 = vlaneseq
    %v581 = vshrl.u32 %v580, 7
    %v582 = vsub.s32 %v579, %v581
    %v583 = vrot.slane %v576, %v582
    %v584 = vcombine.high %v583, %v583
    %v586 = vunpack.c.l.s4 1966171168
    %v587 = vunpack.c.0.s8 %v586
    %v588 = vlaneseq
    %v589 = vshrl.u32 %v588, 7
    %v590 = vsub.s32 %v587, %v589
    %v591 = vrot.slane %v584, %v590
    %v592 = vcombine.high %v591, %v591
    %v594 = vadd.f32 %v573, %v592
    %v595 = vmul.f32 %v523, 0.1
    %v596 = vadd.f32 %v595, 1.0
    %vm597 = vcmp.ge.f32.partialorder %v594, %v596
    %v598 = vsel %vm597, 1, 0
    %v599 = vcvt.s32.f32 %v598
    %v601 = vlaneseq
    %v602 = vshrl.u32 %v601, 7
    %v603 = vsub.s32 0, %v602
    %v604 = vrot.slane %v599, %v603
    %v605 = vlaneseq
    %v606 = vshrl.u32 %v605, 7
    %v607 = vsub.s32 1, %v606
    %v608 = vrot.slane %v599, %v607
    %v611 = vpack.c.bf16 %v604, %v604
    %v612 = vpack.c.bf16 %v608, %v608
    %v613 = vsub.f32 %v594, %v599
    %v614 = vmul.f32 %v523, 0.9
    %v615 = vadd.f32 %v614, %v599
    %616 = vmatprep.subr.bf16.mxu0 %v195
    %617 = vmatpush1.bf16.msra.mxu0 %v194
    %618 = vmatprep.subr.bf16.mxu0 %v197
    %619 = vmatpush1.bf16.msra.mxu0 %v196
    %620 = vmatprep.subr.bf16.mxu0 %v199
    %621 = vmatpush1.bf16.msra.mxu0 %v198
    %622 = vmatprep.subr.bf16.mxu0 %v201
    %623 = vmatpush1.bf16.msra.mxu0 %v200
    %624 = vmatprep.subr.bf16.mxu0 %v203
    %625 = vmatpush1.bf16.msra.mxu0 %v202
    %626 = vmatprep.subr.bf16.mxu0 %v205
    %627 = vmatpush1.bf16.msra.mxu0 %v204
    %628 = vmatprep.subr.bf16.mxu0 %v207
    %629 = vmatpush1.bf16.msra.mxu0 %v206
    %630 = vmatprep.subr.bf16.mxu0 %v209
    %631 = vmatpush1.bf16.msra.mxu0 %v208
    %632 = vmatprep.subr.bf16.mxu0 %v211
    %633 = vmatpush1.bf16.msra.mxu0 %v210
    %634 = vmatprep.subr.bf16.mxu0 %v213
    %635 = vmatpush1.bf16.msra.mxu0 %v212
    %636 = vmatprep.subr.bf16.mxu0 %v215
    %637 = vmatpush1.bf16.msra.mxu0 %v214
    %638 = vmatprep.subr.bf16.mxu0 %v217
    %639 = vmatpush1.bf16.msra.mxu0 %v216
    %640 = vmatprep.subr.bf16.mxu0 %v219
    %641 = vmatpush1.bf16.msra.mxu0 %v218
    %642 = vmatprep.subr.bf16.mxu0 %v221
    %643 = vmatpush1.bf16.msra.mxu0 %v220
    %644 = vmatprep.subr.bf16.mxu0 %v223
    %645 = vmatpush1.bf16.msra.mxu0 %v222
    %646 = vmatprep.subr.bf16.mxu0 %v225
    %647 = vmatpush1.bf16.msra.mxu0 %v224
    %648 = vmatprep.mubr.bf16.mxu0 %v612
    %649 = vmatmul.mubr.bf16.gmra.mrb[0].mxu0 %v611
    %v650 = vpop.f32.mrb[0].mxu0
    %v651 = vadd.f32 0.0, %v650
    %v652 = vpop.f32.mrb[0].mxu0
    %v653 = vadd.f32 0.0, %v652
    %v654 = vpop.f32.mrb[0].mxu0
    %v655 = vpop.f32.mrb[0].mxu0
    %656 = vdwg.mxu0
    %v659 = vrot.slane %v651, 4
    %v660 = vrot.slane %v653, 4
    %v663 = vadd.f32 %v96, %v659
    %v664 = vadd.f32 %v97, %v660
    %v665 = vmul.f32 %v613, 0.9
    %v668 = vcombine.high %v663, %v664
    %v670 = vunpack.c.l.s4 1966171168
    %v671 = vunpack.c.0.s8 %v670
    %v672 = vlaneseq
    %v673 = vshrl.u32 %v672, 7
    %v674 = vsub.s32 %v671, %v673
    %v675 = vrot.slane %v668, %v674
    %v677 = vunpack.c.l.s4 1966171168
    %v678 = vunpack.c.0.s8 %v677
    %v679 = vlaneseq
    %v680 = vshrl.u32 %v679, 7
    %v681 = vsub.s32 %v678, %v680
    %v682 = vrot.slane %v675, %v681
    %v684 = vadd.f32 %v665, %v682
    %v685 = vmul.f32 %v615, 0.1
    %v686 = vadd.f32 %v685, 1.0
    %vm687 = vcmp.ge.f32.partialorder %v684, %v686
    %v688 = vsel %vm687, 1, 0
    %v689 = vcvt.s32.f32 %v688
    %v691 = vlaneseq
    %v692 = vshrl.u32 %v691, 7
    %v693 = vsub.s32 0, %v692
    %v694 = vrot.slane %v689, %v693
    %v695 = vlaneseq
    %v696 = vshrl.u32 %v695, 7
    %v697 = vsub.s32 1, %v696
    %v698 = vrot.slane %v689, %v697
    %v701 = vpack.c.bf16 %v694, %v694
    %v702 = vpack.c.bf16 %v698, %v698
    %v703 = vsub.f32 %v684, %v689
    %v704 = vmul.f32 %v615, 0.9
    %v705 = vadd.f32 %v704, %v689
    %706 = vmatprep.subr.bf16.mxu0 %v195
    %707 = vmatpush1.bf16.msra.mxu0 %v194
    %708 = vmatprep.subr.bf16.mxu0 %v197
    %709 = vmatpush1.bf16.msra.mxu0 %v196
    %710 = vmatprep.subr.bf16.mxu0 %v199
    %711 = vmatpush1.bf16.msra.mxu0 %v198
    %712 = vmatprep.subr.bf16.mxu0 %v201
    %713 = vmatpush1.bf16.msra.mxu0 %v200
    %714 = vmatprep.subr.bf16.mxu0 %v203
    %715 = vmatpush1.bf16.msra.mxu0 %v202
    %716 = vmatprep.subr.bf16.mxu0 %v205
    %717 = vmatpush1.bf16.msra.mxu0 %v204
    %718 = vmatprep.subr.bf16.mxu0 %v207
    %719 = vmatpush1.bf16.msra.mxu0 %v206
    %720 = vmatprep.subr.bf16.mxu0 %v209
    %721 = vmatpush1.bf16.msra.mxu0 %v208
    %722 = vmatprep.subr.bf16.mxu0 %v211
    %723 = vmatpush1.bf16.msra.mxu0 %v210
    %724 = vmatprep.subr.bf16.mxu0 %v213
    %725 = vmatpush1.bf16.msra.mxu0 %v212
    %726 = vmatprep.subr.bf16.mxu0 %v215
    %727 = vmatpush1.bf16.msra.mxu0 %v214
    %728 = vmatprep.subr.bf16.mxu0 %v217
    %729 = vmatpush1.bf16.msra.mxu0 %v216
    %730 = vmatprep.subr.bf16.mxu0 %v219
    %731 = vmatpush1.bf16.msra.mxu0 %v218
    %732 = vmatprep.subr.bf16.mxu0 %v221
    %733 = vmatpush1.bf16.msra.mxu0 %v220
    %734 = vmatprep.subr.bf16.mxu0 %v223
    %735 = vmatpush1.bf16.msra.mxu0 %v222
    %736 = vmatprep.subr.bf16.mxu0 %v225
    %737 = vmatpush1.bf16.msra.mxu0 %v224
    %738 = vmatprep.mubr.bf16.mxu0 %v702
    %739 = vmatmul.mubr.bf16.gmra.mrb[0].mxu0 %v701
    %v740 = vpop.f32.mrb[0].mxu0
    %v741 = vadd.f32 0.0, %v740
    %v742 = vpop.f32.mrb[0].mxu0
    %v743 = vadd.f32 0.0, %v742
    %v744 = vpop.f32.mrb[0].mxu0
    %v745 = vpop.f32.mrb[0].mxu0
    %746 = vdwg.mxu0
    %v749 = vrot.slane %v741, 3
    %v750 = vrot.slane %v743, 3
    %v753 = vadd.f32 %v96, %v749
    %v754 = vadd.f32 %v97, %v750
    %v755 = vmul.f32 %v703, 0.9
    %v758 = vcombine.high %v753, %v754
    %v760 = vunpack.c.l.s4 1966171168
    %v761 = vunpack.c.0.s8 %v760
    %v762 = vlaneseq
    %v763 = vshrl.u32 %v762, 7
    %v764 = vsub.s32 %v761, %v763
    %v765 = vrot.slane %v758, %v764
    %v766 = vcombine.high %v765, %v765
    %v768 = vunpack.c.l.s4 1966171168
    %v769 = vunpack.c.0.s8 %v768
    %v770 = vlaneseq
    %v771 = vshrl.u32 %v770, 7
    %v772 = vsub.s32 %v769, %v771
    %v773 = vrot.slane %v766, %v772
    %v775 = vadd.f32 %v755, %v773
    %v776 = vmul.f32 %v705, 0.1
    %v777 = vadd.f32 %v776, 1.0
    %vm778 = vcmp.ge.f32.partialorder %v775, %v777
    %v779 = vsel %vm778, 1, 0
    %v780 = vcvt.s32.f32 %v779
    %v782 = vlaneseq
    %v783 = vshrl.u32 %v782, 7
    %v784 = vsub.s32 0, %v783
    %v785 = vrot.slane %v780, %v784
    %v786 = vlaneseq
    %v787 = vshrl.u32 %v786, 7
    %v788 = vsub.s32 1, %v787
    %v789 = vrot.slane %v780, %v788
    %v792 = vpack.c.bf16 %v785, %v785
    %v793 = vpack.c.bf16 %v789, %v789
    %v794 = vsub.f32 %v775, %v780
    %v795 = vmul.f32 %v705, 0.9
    %v796 = vadd.f32 %v795, %v780
    %797 = vmatprep.subr.bf16.mxu0 %v195
    %798 = vmatpush1.bf16.msra.mxu0 %v194
    %799 = vmatprep.subr.bf16.mxu0 %v197
    %800 = vmatpush1.bf16.msra.mxu0 %v196
    %801 = vmatprep.subr.bf16.mxu0 %v199
    %802 = vmatpush1.bf16.msra.mxu0 %v198
    %803 = vmatprep.subr.bf16.mxu0 %v201
    %804 = vmatpush1.bf16.msra.mxu0 %v200
    %805 = vmatprep.subr.bf16.mxu0 %v203
    %806 = vmatpush1.bf16.msra.mxu0 %v202
    %807 = vmatprep.subr.bf16.mxu0 %v205
    %808 = vmatpush1.bf16.msra.mxu0 %v204
    %809 = vmatprep.subr.bf16.mxu0 %v207
    %810 = vmatpush1.bf16.msra.mxu0 %v206
    %811 = vmatprep.subr.bf16.mxu0 %v209
    %812 = vmatpush1.bf16.msra.mxu0 %v208
    %813 = vmatprep.subr.bf16.mxu0 %v211
    %814 = vmatpush1.bf16.msra.mxu0 %v210
    %815 = vmatprep.subr.bf16.mxu0 %v213
    %816 = vmatpush1.bf16.msra.mxu0 %v212
    %817 = vmatprep.subr.bf16.mxu0 %v215
    %818 = vmatpush1.bf16.msra.mxu0 %v214
    %819 = vmatprep.subr.bf16.mxu0 %v217
    %820 = vmatpush1.bf16.msra.mxu0 %v216
    %821 = vmatprep.subr.bf16.mxu0 %v219
    %822 = vmatpush1.bf16.msra.mxu0 %v218
    %823 = vmatprep.subr.bf16.mxu0 %v221
    %824 = vmatpush1.bf16.msra.mxu0 %v220
    %825 = vmatprep.subr.bf16.mxu0 %v223
    %826 = vmatpush1.bf16.msra.mxu0 %v222
    %827 = vmatprep.subr.bf16.mxu0 %v225
    %828 = vmatpush1.bf16.msra.mxu0 %v224
    %829 = vmatprep.mubr.bf16.mxu0 %v793
    %830 = vmatmul.mubr.bf16.gmra.mrb[0].mxu0 %v792
    %v831 = vpop.f32.mrb[0].mxu0
    %v832 = vadd.f32 0.0, %v831
    %v833 = vpop.f32.mrb[0].mxu0
    %v834 = vadd.f32 0.0, %v833
    %v835 = vpop.f32.mrb[0].mxu0
    %v836 = vpop.f32.mrb[0].mxu0
    %837 = vdwg.mxu0
    %v840 = vrot.slane %v832, 2
    %v841 = vrot.slane %v834, 2
    %v844 = vadd.f32 %v96, %v840
    %v845 = vadd.f32 %v97, %v841
    %v846 = vmul.f32 %v794, 0.9
    %v849 = vcombine.high %v844, %v845
    %v851 = vunpack.c.l.s4 1966171168
    %v852 = vunpack.c.0.s8 %v851
    %v853 = vlaneseq
    %v854 = vshrl.u32 %v853, 7
    %v855 = vsub.s32 %v852, %v854
    %v856 = vrot.slane %v849, %v855
    %v858 = vunpack.c.l.s4 1966171168
    %v859 = vunpack.c.0.s8 %v858
    %v860 = vlaneseq
    %v861 = vshrl.u32 %v860, 7
    %v862 = vsub.s32 %v859, %v861
    %v863 = vrot.slane %v856, %v862
    %v864 = vcombine.high %v863, %v863
    %v866 = vadd.f32 %v846, %v864
    %v867 = vmul.f32 %v796, 0.1
    %v868 = vadd.f32 %v867, 1.0
    %vm869 = vcmp.ge.f32.partialorder %v866, %v868
    %v870 = vsel %vm869, 1, 0
    %v871 = vcvt.s32.f32 %v870
    %v873 = vlaneseq
    %v874 = vshrl.u32 %v873, 7
    %v875 = vsub.s32 0, %v874
    %v876 = vrot.slane %v871, %v875
    %v877 = vlaneseq
    %v878 = vshrl.u32 %v877, 7
    %v879 = vsub.s32 1, %v878
    %v880 = vrot.slane %v871, %v879
    %v883 = vpack.c.bf16 %v876, %v876
    %v884 = vpack.c.bf16 %v880, %v880
    %v885 = vsub.f32 %v866, %v871
    %v886 = vmul.f32 %v796, 0.9
    %v887 = vadd.f32 %v886, %v871
    %888 = vmatprep.subr.bf16.mxu0 %v195
    %889 = vmatpush1.bf16.msra.mxu0 %v194
    %890 = vmatprep.subr.bf16.mxu0 %v197
    %891 = vmatpush1.bf16.msra.mxu0 %v196
    %892 = vmatprep.subr.bf16.mxu0 %v199
    %893 = vmatpush1.bf16.msra.mxu0 %v198
    %894 = vmatprep.subr.bf16.mxu0 %v201
    %895 = vmatpush1.bf16.msra.mxu0 %v200
    %896 = vmatprep.subr.bf16.mxu0 %v203
    %897 = vmatpush1.bf16.msra.mxu0 %v202
    %898 = vmatprep.subr.bf16.mxu0 %v205
    %899 = vmatpush1.bf16.msra.mxu0 %v204
    %900 = vmatprep.subr.bf16.mxu0 %v207
    %901 = vmatpush1.bf16.msra.mxu0 %v206
    %902 = vmatprep.subr.bf16.mxu0 %v209
    %903 = vmatpush1.bf16.msra.mxu0 %v208
    %904 = vmatprep.subr.bf16.mxu0 %v211
    %905 = vmatpush1.bf16.msra.mxu0 %v210
    %906 = vmatprep.subr.bf16.mxu0 %v213
    %907 = vmatpush1.bf16.msra.mxu0 %v212
    %908 = vmatprep.subr.bf16.mxu0 %v215
    %909 = vmatpush1.bf16.msra.mxu0 %v214
    %910 = vmatprep.subr.bf16.mxu0 %v217
    %911 = vmatpush1.bf16.msra.mxu0 %v216
    %912 = vmatprep.subr.bf16.mxu0 %v219
    %913 = vmatpush1.bf16.msra.mxu0 %v218
    %914 = vmatprep.subr.bf16.mxu0 %v221
    %915 = vmatpush1.bf16.msra.mxu0 %v220
    %916 = vmatprep.subr.bf16.mxu0 %v223
    %917 = vmatpush1.bf16.msra.mxu0 %v222
    %918 = vmatprep.subr.bf16.mxu0 %v225
    %919 = vmatpush1.bf16.msra.mxu0 %v224
    %920 = vmatprep.mubr.bf16.mxu0 %v884
    %921 = vmatmul.mubr.bf16.gmra.mrb[0].mxu0 %v883
    %v922 = vpop.f32.mrb[0].mxu0
    %v923 = vadd.f32 0.0, %v922
    %v924 = vpop.f32.mrb[0].mxu0
    %v925 = vadd.f32 0.0, %v924
    %v926 = vpop.f32.mrb[0].mxu0
    %v927 = vpop.f32.mrb[0].mxu0
    %928 = vdwg.mxu0
    %v931 = vrot.slane %v923, 1
    %v932 = vrot.slane %v925, 1
    %v935 = vadd.f32 %v96, %v931
    %v936 = vadd.f32 %v97, %v932
    %v937 = vmul.f32 %v885, 0.9
    %v940 = vcombine.high %v935, %v936
    %v942 = vunpack.c.l.s4 1966171168
    %v943 = vunpack.c.0.s8 %v942
    %v944 = vlaneseq
    %v945 = vshrl.u32 %v944, 7
    %v946 = vsub.s32 %v943, %v945
    %v947 = vrot.slane %v940, %v946
    %v948 = vcombine.high %v947, %v947
    %v950 = vunpack.c.l.s4 1966171168
    %v951 = vunpack.c.0.s8 %v950
    %v952 = vlaneseq
    %v953 = vshrl.u32 %v952, 7
    %v954 = vsub.s32 %v951, %v953
    %v955 = vrot.slane %v948, %v954
    %v956 = vcombine.high %v955, %v955
    %v958 = vadd.f32 %v937, %v956
    %v959 = vmul.f32 %v887, 0.1
    %v960 = vadd.f32 %v959, 1.0
    %vm961 = vcmp.ge.f32.partialorder %v958, %v960
    %v962 = vsel %vm961, 1, 0
    %v963 = vcvt.s32.f32 %v962
    %v965 = vlaneseq
    %v966 = vshrl.u32 %v965, 7
    %v967 = vsub.s32 0, %v966
    %v968 = vrot.slane %v963, %v967
    %v969 = vlaneseq
    %v970 = vshrl.u32 %v969, 7
    %v971 = vsub.s32 1, %v970
    %v972 = vrot.slane %v963, %v971
    %v975 = vpack.c.bf16 %v968, %v968
    %v976 = vpack.c.bf16 %v972, %v972
    %v977 = vsub.f32 %v958, %v963
    %v978 = vmul.f32 %v887, 0.9
    %v979 = vadd.f32 %v978, %v963
    %v981 = vlaneseq
    %v982 = vshrl.u32 %v981, 7
    %v983 = vsub.s32 0, %v982
    %v984 = vrot.slane %v339, %v983
    %v985 = vlaneseq
    %v986 = vshrl.u32 %v985, 7
    %v987 = vsub.s32 1, %v986
    %v988 = vrot.slane %v339, %v987
    %v992 = vlaneseq
    %v993 = vshrl.u32 %v992, 7
    %v994 = vsub.s32 0, %v993
    %v995 = vrot.slane %v430, %v994
    %v996 = vlaneseq
    %v997 = vshrl.u32 %v996, 7
    %v998 = vsub.s32 1, %v997
    %v999 = vrot.slane %v430, %v998
    %v1003 = vlaneseq
    %v1004 = vshrl.u32 %v1003, 7
    %v1005 = vsub.s32 0, %v1004
    %v1006 = vrot.slane %v521, %v1005
    %v1007 = vlaneseq
    %v1008 = vshrl.u32 %v1007, 7
    %v1009 = vsub.s32 1, %v1008
    %v1010 = vrot.slane %v521, %v1009
    %v1014 = vlaneseq
    %v1015 = vshrl.u32 %v1014, 7
    %v1016 = vsub.s32 0, %v1015
    %v1017 = vrot.slane %v613, %v1016
    %v1018 = vlaneseq
    %v1019 = vshrl.u32 %v1018, 7
    %v1020 = vsub.s32 1, %v1019
    %v1021 = vrot.slane %v613, %v1020
    %v1025 = vlaneseq
    %v1026 = vshrl.u32 %v1025, 7
    %v1027 = vsub.s32 0, %v1026
    %v1028 = vrot.slane %v703, %v1027
    %v1029 = vlaneseq
    %v1030 = vshrl.u32 %v1029, 7
    %v1031 = vsub.s32 1, %v1030
    %v1032 = vrot.slane %v703, %v1031
    %v1036 = vlaneseq
    %v1037 = vshrl.u32 %v1036, 7
    %v1038 = vsub.s32 0, %v1037
    %v1039 = vrot.slane %v794, %v1038
    %v1040 = vlaneseq
    %v1041 = vshrl.u32 %v1040, 7
    %v1042 = vsub.s32 1, %v1041
    %v1043 = vrot.slane %v794, %v1042
    %v1047 = vlaneseq
    %v1048 = vshrl.u32 %v1047, 7
    %v1049 = vsub.s32 0, %v1048
    %v1050 = vrot.slane %v885, %v1049
    %v1051 = vlaneseq
    %v1052 = vshrl.u32 %v1051, 7
    %v1053 = vsub.s32 1, %v1052
    %v1054 = vrot.slane %v885, %v1053
    %v1058 = vlaneseq
    %v1059 = vshrl.u32 %v1058, 7
    %v1060 = vsub.s32 0, %v1059
    %v1061 = vrot.slane %v977, %v1060
    %v1062 = vlaneseq
    %v1063 = vshrl.u32 %v1062, 7
    %v1064 = vsub.s32 1, %v1063
    %v1065 = vrot.slane %v977, %v1064
    %vm1068 = vcmask 1040384
    %v1069 = vsel %vm1068, %v984, %v995
    %v1070 = vsel %vm1068, %v988, %v999
    %vm1071 = vcmask 1041408
    %v1072 = vsel %vm1071, %v1069, %v1006
    %v1073 = vsel %vm1071, %v1070, %v1010
    %vm1074 = vcmask 1042432
    %v1075 = vsel %vm1074, %v1072, %v1017
    %v1076 = vsel %vm1074, %v1073, %v1021
    %vm1077 = vcmask 1043456
    %v1078 = vsel %vm1077, %v1075, %v1028
    %v1079 = vsel %vm1077, %v1076, %v1032
    %vm1080 = vcmask 1044480
    %v1081 = vsel %vm1080, %v1078, %v1039
    %v1082 = vsel %vm1080, %v1079, %v1043
    %vm1083 = vcmask 1045504
    %v1084 = vsel %vm1083, %v1081, %v1050
    %v1085 = vsel %vm1083, %v1082, %v1054
    %vm1086 = vcmask 1046528
    %v1087 = vsel %vm1086, %v1084, %v1061
    %v1088 = vsel %vm1086, %v1085, %v1065
    %s1089 = smul.addr %s93, 8
    %s1090 = scalar_lea.vmem [#allocation8], %s1089
    %1091 = vst [vmem:[%s1090] sm:$0xff] %v1087
    %1092 = vst [vmem:[%s1090 + $0x8] sm:$0xff] %v1088
    %v1093 = vunpack.c.l.bf16 %v975
    %v1094 = vunpack.c.l.bf16 %v976
    %v1096 = vlaneseq
    %v1097 = vshrl.u32 %v1096, 7
    %v1098 = vsub.s32 0, %v1097
    %v1099 = vrot.slane %v979, %v1098
    %v1100 = vlaneseq
    %v1101 = vshrl.u32 %v1100, 7
    %v1102 = vsub.s32 1, %v1101
    %v1103 = vrot.slane %v979, %v1102
    %v1108 = vrot.slane %v1093, 6
    %v1109 = vrot.slane %v1094, 6
    %v1112 = vsel %vm1068, %v1061, %v1099
    %v1113 = vsel %vm1068, %v1065, %v1103
    %v1114 = vsel %vm1071, %v1112, %v1108
    %v1115 = vsel %vm1071, %v1113, %v1109
    %v1118 = vcombine.low %v1114, %v1115
    %1120 = vst [vmem:[#allocation2] sm:$0x77] %v1118
    // Predicated region
    $region22: #{tpu_custom_call.1} parent=1 // pred_check
      _
    $region23: #{tpu_custom_call.1} parent=1 // pred_check_branch
      %1122 = sbr.rel (0) target = $region25
    $region24: #{tpu_custom_call.1} parent=1 // pred_region
      %s1124 = ssub.s32 256, 256
      %1125 = vsyncadd [#allocation5], %s1124
      %s1127 = sshll.u32 [#allocation8], 4
      %s1128 = int_to_ptr.vmem [resolvable:$true] %s1127
      %1130 = dma.vmem_to_hbm [thread:$0]  %s1128, 256, %s2, [#allocation5]
    $region25: #{tpu_custom_call.1} parent=1 // pred_fallthru
      _
    // Predicated region
    $region26: #{tpu_custom_call.1} parent=1 // pred_check
      _
    $region27: #{tpu_custom_call.1} parent=1 // pred_check_branch
      %1132 = sbr.rel (0) target = $region29
    $region28: #{tpu_custom_call.1} parent=1 // pred_region
      %1133 = dma.done [#allocation5], 256
    $region29: #{tpu_custom_call.1} parent=1 // pred_fallthru
      _
    %1134 = vsyncpa [#allocation4], 1
    %1135 = vsyncpa [#allocation7], 1
    %1136 = vsyncpa [#allocation5], 1

</llo_original>
